<compile_context>
chip_gen: v7x
topology: tpu7x:2x2x1
jax: 0.10.0
libtpu: 0.0.40
codegen_flags: <defaults>
</compile_context>

<pallas_src>
import functools

import jax
import jax.numpy as jnp
from jax import lax
from jax.experimental import pallas as pl
from jax.experimental.pallas import tpu as pltpu


def _round_up(x, m):
    return ((x + m - 1) // m) * m


def _cdiv(a, b):
    return -(-a // b)


def _linear_topk_kernel(x_ref, w_ref, o_ref, acc_ref, *, k, out_valid):
    """One (batch_tile, OUT) output tile, accumulated over the K grid axis.

    x_ref:   (TB, TK)    bf16
    w_ref:   (TK, OUTp)  bf16
    o_ref:   (TB, OUTp)  f32
    acc_ref: (TB, OUTp)  f32 scratch (persists across the K axis)
    """
    kk = pl.program_id(1)

    @pl.when(kk == 0)
    def _init():
        acc_ref[...] = jnp.zeros_like(acc_ref)

    acc_ref[...] += jnp.dot(x_ref[...], w_ref[...],
                            preferred_element_type=jnp.float32)

    @pl.when(kk == pl.num_programs(1) - 1)
    def _finalize():
        y = acc_ref[...]                                   # (TB, OUTp) f32

        # Mask padded OUT lanes so they can never enter the top-k.
        if out_valid != y.shape[-1]:                       # static
            col = lax.broadcasted_iota(jnp.int32, y.shape, 1)
            y_rank = jnp.where(col < out_valid, y, -jnp.inf)
        else:
            y_rank = y

        if k <= 8:
            # Small k: peel the row max k times (k cross-lane max reduces).
            work = y_rank
            thresh = jnp.max(work, axis=-1, keepdims=True)
            for _ in range(k - 1):
                work = jnp.where(work == thresh, -jnp.inf, work)
                thresh = jnp.max(work, axis=-1, keepdims=True)
            keep = y_rank >= thresh
        else:
            # Large k: exact k-th largest value via a 32-step bitwise search
            # on the order-preserving int32 encoding of f32.  Cost is
            # independent of k (31 compare+count iterations).
            raw = pltpu.bitcast(y_rank, jnp.int32)
            ordered = jnp.where(raw < 0, raw ^ jnp.int32(0x7FFFFFFF), raw)
            nonneg = jnp.sum((ordered >= 0).astype(jnp.int32),
                             axis=-1, keepdims=True)
            prefix = jnp.where(nonneg >= k, jnp.int32(0),
                               jnp.int32(-(2 ** 31)))
            for b in range(30, -1, -1):
                cand = prefix + jnp.int32(1 << b)
                cnt = jnp.sum((ordered >= cand).astype(jnp.int32),
                              axis=-1, keepdims=True)
                prefix = jnp.where(cnt >= k, cand, prefix)
            keep = ordered >= prefix

        o_ref[...] = jnp.where(keep, y, 0.0).astype(o_ref.dtype)


def aha_dg_sparse_linear_mlp(x_flat, weight_t, *, sparsity,
                             batch_tile=None, k_tile=None):
    """x_flat: (B, IN) f32, weight_t: (IN, OUT) f32 -> (B, OUT) f32."""
    B, IN = x_flat.shape
    IN_w, OUT = weight_t.shape
    assert IN == IN_w
    assert sparsity >= 1
    k = min(int(sparsity), OUT)

    # ---- tiling -----------------------------------------------------------
    if batch_tile is None:
        batch_tile = 256
        # prefer >=2 batch tiles (DMA/compute overlap; v7x has 2 TensorCores)
        while batch_tile > 8 and _cdiv(B, batch_tile) < 2:
            batch_tile //= 2
    assert batch_tile % 8 == 0

    if k_tile is None:
        k_tile = 512
    if k_tile >= IN:
        k_tile = IN                       # single K step, full-dim block
    else:
        k_tile = max(128, (k_tile // 128) * 128)   # lane-aligned K tiles

    Bp = _round_up(B, batch_tile)
    INp = IN if k_tile == IN else _round_up(IN, k_tile)
    OUTp = _round_up(OUT, 128)            # lane-dense output stores

    # ---- pad + cast to bf16 (f32 accumulation happens on the MXU) ---------
    x_p = x_flat
    if (Bp, INp) != (B, IN):
        x_p = jnp.pad(x_flat, ((0, Bp - B), (0, INp - IN)))
    w_p = weight_t
    if (INp, OUTp) != (IN, OUT):
        w_p = jnp.pad(weight_t, ((0, INp - IN), (0, OUTp - OUT)))
    x_p = x_p.astype(jnp.bfloat16)
    w_p = w_p.astype(jnp.bfloat16)

    nb = Bp // batch_tile
    nk = INp // k_tile

    kernel = functools.partial(_linear_topk_kernel, k=k, out_valid=OUT)

    # rough scoped-VMEM budget: double-buffered x/w/out tiles + f32 acc
    vmem_need = (2 * batch_tile * k_tile * 2
                 + 2 * k_tile * OUTp * 2
                 + 2 * batch_tile * OUTp * 4
                 + batch_tile * OUTp * 4)
    vmem_limit = int(min(max(2 * vmem_need + (4 << 20), 16 << 20), 64 << 20))

    out = pl.pallas_call(
        kernel,
        out_shape=jax.ShapeDtypeStruct((Bp, OUTp), jnp.float32),
        grid_spec=pltpu.PrefetchScalarGridSpec(
            num_scalar_prefetch=0,
            grid=(nb, nk),
            in_specs=[
                pl.BlockSpec((batch_tile, k_tile), lambda i, kk: (i, kk)),
                pl.BlockSpec((k_tile, OUTp), lambda i, kk: (kk, 0)),
            ],
            out_specs=pl.BlockSpec((batch_tile, OUTp), lambda i, kk: (i, 0)),
            scratch_shapes=[pltpu.VMEM((batch_tile, OUTp), jnp.float32)],
        ),
        compiler_params=pltpu.CompilerParams(
            dimension_semantics=("parallel", "arbitrary"),
            vmem_limit_bytes=vmem_limit,
        ),
        cost_estimate=pl.CostEstimate(
            flops=2 * Bp * INp * OUTp,
            transcendentals=0,
            bytes_accessed=2 * Bp * INp + 2 * INp * OUTp * nb + 4 * Bp * OUTp,
        ),
    )(x_p, w_p)

    if (Bp, OUTp) != (B, OUT):
        out = out[:B, :OUT]
    return out


def make_dg_weight(key, in_channels, out_channels, knockout_rate, init_scale):
    """Deterministic re-implementation of reset_parameters().

    Returns weight in PyTorch layout (out_channels, in_channels).
    """
    # TODO(synk): torch.rand / np.random.choice streams cannot be reproduced
    # bit-exactly in JAX; same distribution, different RNG.
    k_rand, k_mask = jax.random.split(key)
    num_weights = out_channels * in_channels
    random_values = jax.random.uniform(k_rand, (num_weights,), dtype=jnp.float32)
    keep_rate = 1.0 - knockout_rate
    initial_mask = (
        jax.random.uniform(k_mask, (num_weights,), dtype=jnp.float32) < keep_rate
    ).astype(jnp.float32)
    initial_values = random_values * initial_mask * init_scale
    initial_values = initial_values.reshape(out_channels, in_channels)
    abs_sum = jnp.sum(jnp.abs(initial_values), axis=1, keepdims=True)
    return initial_values * (1.0 / abs_sum)


def reference_forward(x_flat, weight_t, sparsity):
    """Pure-JAX reference: bias-free Linear (same bf16 inputs, f32 acc) +
    top-k sparsification (keep values >= k-th largest per row)."""
    y = jnp.dot(x_flat.astype(jnp.bfloat16), weight_t.astype(jnp.bfloat16),
                preferred_element_type=jnp.float32)
    kk = min(sparsity, y.shape[1])
    thresh = jnp.sort(y, axis=1)[:, -kk][:, None]
    return jnp.where(y >= thresh, y, 0.0)


if __name__ == "__main__":
    # Small shapes consistent with the module's forward (x is a 1-element
    # list of an NCHW conv feature map; in_channels = C*H*W).
    B, C, H, W = 16, 4, 8, 8          # flattened features = 256
    in_channels = C * H * W           # 256
    out_channels = 256
    sparsity = 4
    knockout_rate = 0.25
    init_scale = 10.0

    key = jax.random.PRNGKey(0)
    k_x, k_w = jax.random.split(key)

    x_nchw = jax.random.normal(k_x, (B, C, H, W), dtype=jnp.float32)
    weight = make_dg_weight(k_w, in_channels, out_channels,
                            knockout_rate, init_scale)   # (OUT, IN) torch layout

    # forward: x = x[0]; flatten; linear; top-k mask.
    x_list = [x_nchw]
    assert len(x_list) == 1
    x_flat = x_list[0].reshape(B, -1)                    # (B, IN)
    weight_t = weight.T                                  # (IN, OUT) kernel layout

    # batch_tile=8 -> even-length 2-step parallel batch grid;
    # k_tile=128   -> exercises the K-accumulation (weight-slab) path.
    out = aha_dg_sparse_linear_mlp(x_flat, weight_t, sparsity=sparsity,
                                   batch_tile=8, k_tile=128)
    out = jax.block_until_ready(out)

    ref = reference_forward(x_flat, weight_t, sparsity)
    assert out.shape == (B, out_channels)
    assert jnp.allclose(out, ref, atol=1e-4, rtol=1e-3), "mismatch vs reference"
    # random floats -> no ties -> exactly `sparsity` nonzeros per row
    assert bool(jnp.all(jnp.sum(out != 0.0, axis=1) == sparsity))

    # Larger sparsity exercises the k-independent bitwise threshold search.
    sparsity2 = 24
    out2 = aha_dg_sparse_linear_mlp(x_flat, weight_t, sparsity=sparsity2,
                                    batch_tile=8, k_tile=128)
    out2 = jax.block_until_ready(out2)
    ref2 = reference_forward(x_flat, weight_t, sparsity2)
    assert jnp.allclose(out2, ref2, atol=1e-4, rtol=1e-3), "mismatch (large k)"
    assert bool(jnp.all(jnp.sum(out2 != 0.0, axis=1) == sparsity2))

    print("KERNEL_OK")
</pallas_src>

<mosaic_0001>
module attributes {stable_mosaic.version = 11 : i64} {
  func.func @_linear_topk_kernel(%arg0: i32, %arg1: i32, %arg2: memref<8x128xbf16, #tpu.memory_space<vmem>>, %arg3: memref<128x256xbf16, #tpu.memory_space<vmem>>, %arg4: memref<8x256xf32, #tpu.memory_space<vmem>>, %arg5: memref<8x256xf32, #tpu.memory_space<vmem>>) attributes {dimension_semantics = [#tpu.dimension_semantics<parallel>, #tpu.dimension_semantics<arbitrary>], iteration_bounds = array<i64: 2, 2>, scalar_prefetch = 0 : i64, scratch_operands = 1 : i64, tpu.core_type = #tpu.core_type<tc>, window_params = [{transform_indices = @transform_0, window_bounds = array<i64: 8, 128>}, {transform_indices = @transform_1, window_bounds = array<i64: 128, 256>}, {transform_indices = @transform_2, window_bounds = array<i64: 8, 256>}]} {
    %c0_i32 = arith.constant 0 : i32
    %0 = arith.cmpi eq, %arg1, %c0_i32 : i32
    %1 = arith.extui %0 : i1 to i32
    %c0_i32_0 = arith.constant 0 : i32
    %2 = arith.cmpi ne, %1, %c0_i32_0 : i32
    scf.if %2 {
      %cst_9 = arith.constant 0.000000e+00 : f32
      %12 = vector.broadcast %cst_9 : f32 to vector<8x256xf32>
      %c0_10 = arith.constant 0 : index
      %c0_11 = arith.constant 0 : index
      %13 = vector.load %arg5[%c0_10, %c0_11] : memref<8x256xf32, #tpu.memory_space<vmem>>, vector<8x256xf32>
      tpu.vector_store %arg5[%c0_10, %c0_11], %12 {strides = array<i32>} : memref<8x256xf32, #tpu.memory_space<vmem>>, vector<8x256xf32>,
    } else {
    }
    %c0 = arith.constant 0 : index
    %c0_1 = arith.constant 0 : index
    %3 = vector.load %arg5[%c0, %c0_1] : memref<8x256xf32, #tpu.memory_space<vmem>>, vector<8x256xf32>
    %c0_2 = arith.constant 0 : index
    %c0_3 = arith.constant 0 : index
    %4 = vector.load %arg2[%c0_2, %c0_3] : memref<8x128xbf16, #tpu.memory_space<vmem>>, vector<8x128xbf16>
    %c0_4 = arith.constant 0 : index
    %c0_5 = arith.constant 0 : index
    %5 = vector.load %arg3[%c0_4, %c0_5] : memref<128x256xbf16, #tpu.memory_space<vmem>>, vector<128x256xbf16>
    %cst = arith.constant dense<0.000000e+00> : vector<8x256xf32>
    %6 = tpu.matmul %4, %5, %cst {dimension_numbers = #tpu.dot_dimension_numbers<[1], [0], [0], [1], [0, 0, 1, 1], [], []>} : vector<8x128xbf16>, vector<128x256xbf16>, vector<8x256xf32> -> vector<8x256xf32>
    %7 = arith.addf %3, %6 : vector<8x256xf32>
    %c0_6 = arith.constant 0 : index
    %c0_7 = arith.constant 0 : index
    %8 = vector.load %arg5[%c0_6, %c0_7] : memref<8x256xf32, #tpu.memory_space<vmem>>, vector<8x256xf32>
    tpu.vector_store %arg5[%c0_6, %c0_7], %7 {strides = array<i32>} : memref<8x256xf32, #tpu.memory_space<vmem>>, vector<8x256xf32>,
    %c1_i32 = arith.constant 1 : i32
    %9 = arith.cmpi eq, %arg1, %c1_i32 : i32
    %10 = arith.extui %9 : i1 to i32
    %c0_i32_8 = arith.constant 0 : i32
    %11 = arith.cmpi ne, %10, %c0_i32_8 : i32
    scf.if %11 {
      %c0_9 = arith.constant 0 : index
      %c0_10 = arith.constant 0 : index
      %12 = vector.load %arg5[%c0_9, %c0_10] : memref<8x256xf32, #tpu.memory_space<vmem>>, vector<8x256xf32>
      %cst_11 = arith.constant dense<0xFF800000> : vector<8xf32>
      %13 = vector.multi_reduction <maximumf>, %12, %cst_11 [1] : vector<8x256xf32> to vector<8xf32>
      %14 = vector.shape_cast %13 : vector<8xf32> to vector<8x1xf32>
      %15 = vector.broadcast %14 : vector<8x1xf32> to vector<8x256xf32>
      %16 = arith.cmpf oeq, %12, %15 : vector<8x256xf32>
      %cst_12 = arith.constant 0xFF800000 : f32
      %17 = vector.broadcast %cst_12 : f32 to vector<8x256xf32>
      %18 = arith.select %16, %17, %12 : vector<8x256xi1>, vector<8x256xf32>
      %cst_13 = arith.constant dense<0xFF800000> : vector<8xf32>
      %19 = vector.multi_reduction <maximumf>, %18, %cst_13 [1] : vector<8x256xf32> to vector<8xf32>
      %20 = vector.shape_cast %19 : vector<8xf32> to vector<8x1xf32>
      %21 = vector.broadcast %20 : vector<8x1xf32> to vector<8x256xf32>
      %22 = arith.cmpf oeq, %18, %21 : vector<8x256xf32>
      %cst_14 = arith.constant 0xFF800000 : f32
      %23 = vector.broadcast %cst_14 : f32 to vector<8x256xf32>
      %24 = arith.select %22, %23, %18 : vector<8x256xi1>, vector<8x256xf32>
      %cst_15 = arith.constant dense<0xFF800000> : vector<8xf32>
      %25 = vector.multi_reduction <maximumf>, %24, %cst_15 [1] : vector<8x256xf32> to vector<8xf32>
      %26 = vector.shape_cast %25 : vector<8xf32> to vector<8x1xf32>
      %27 = vector.broadcast %26 : vector<8x1xf32> to vector<8x256xf32>
      %28 = arith.cmpf oeq, %24, %27 : vector<8x256xf32>
      %cst_16 = arith.constant 0xFF800000 : f32
      %29 = vector.broadcast %cst_16 : f32 to vector<8x256xf32>
      %30 = arith.select %28, %29, %24 : vector<8x256xi1>, vector<8x256xf32>
      %cst_17 = arith.constant dense<0xFF800000> : vector<8xf32>
      %31 = vector.multi_reduction <maximumf>, %30, %cst_17 [1] : vector<8x256xf32> to vector<8xf32>
      %32 = vector.shape_cast %31 : vector<8xf32> to vector<8x1xf32>
      %33 = vector.broadcast %32 : vector<8x1xf32> to vector<8x256xf32>
      %34 = arith.cmpf oge, %12, %33 : vector<8x256xf32>
      %cst_18 = arith.constant 0.000000e+00 : f32
      %35 = vector.broadcast %cst_18 : f32 to vector<8x256xf32>
      %36 = arith.select %34, %12, %35 : vector<8x256xi1>, vector<8x256xf32>
      %c0_19 = arith.constant 0 : index
      %c0_20 = arith.constant 0 : index
      %37 = vector.load %arg4[%c0_19, %c0_20] : memref<8x256xf32, #tpu.memory_space<vmem>>, vector<8x256xf32>
      tpu.vector_store %arg4[%c0_19, %c0_20], %36 {strides = array<i32>} : memref<8x256xf32, #tpu.memory_space<vmem>>, vector<8x256xf32>,
    } else {
    }
    return
  }
  func.func @transform_0(%arg0: i32, %arg1: i32) -> (i32, i32) {
    %c0_i32 = arith.constant 0 : i32
    return %arg0, %arg1 : i32, i32
  }
  func.func @transform_1(%arg0: i32, %arg1: i32) -> (i32, i32) {
    %c0_i32 = arith.constant 0 : i32
    %c0_i32_0 = arith.constant 0 : i32
    return %arg1, %c0_i32 : i32, i32
  }
  func.func @transform_2(%arg0: i32, %arg1: i32) -> (i32, i32) {
    %c0_i32 = arith.constant 0 : i32
    %c0_i32_0 = arith.constant 0 : i32
    return %arg0, %c0_i32 : i32, i32
  }
}

</mosaic_0001>

<llo_original>
// kernel: tpu_custom_call.1
$region0: #{tpu_custom_call.1}
  #allocation0 [shape = 'u32[]', space=smem, size = 0x4, offset = 0x4, fixed_abs, tag = 'smem constant byte address 0x4 - core index']
  #allocation1 [shape = 'u32[144,128]{1,0:T(1,128)}', space=vmem, size = 0x12000, scoped, tag = 'internal scratch']
  #allocation2 [shape = 'f32[8,256]{1,0:T(8,128)}', space=vmem, size = 0x2000, scoped, tag = 'scratch operand']
  %s0 = inlined_call_operand.hbm [shape: bf16[16,256], index: 0, kind: input, shape index: {}]
  %s1 = inlined_call_operand.hbm [shape: bf16[256,256], index: 1, kind: input, shape index: {}]
  %s2 = inlined_call_operand.hbm [shape: f32[16,256], index: 2, kind: output, shape index: {}]
  %s3 = sld [smem:[#allocation0]]
  $region57: #{tpu_custom_call.1} parent=0
    _
  %s5 = ssub.s32 1, %s3
  %s6 = scalar_select 0, %s5, %s3
  $region1: #{tpu_custom_call.1} parent=0
    #allocation3 [shape = 'u8[4096]{0}', space=vmem, size = 0x1000, scoped, tag = 'input window, operand 0']
    #allocation4 [shape = 's32[2]{0}', space=sflag, size = 0x8, scoped, tag = 'scoped memory for tpu_custom_call.1']
    #allocation5 [shape = 's32[2]{0}', space=sflag, size = 0x8, scoped, tag = 'scoped memory for tpu_custom_call.1']
    #allocation6 [shape = 'u8[131072]{0}', space=vmem, size = 0x20000, scoped, tag = 'input window, operand 1']
    #allocation7 [shape = 's32[2]{0}', space=sflag, size = 0x8, scoped, tag = 'scoped memory for tpu_custom_call.1']
    #allocation8 [shape = 'u8[16384]{0}', space=vmem, size = 0x4000, scoped, tag = 'output window, operand 0']
    %7 = vsyncpa [#allocation4], 0
    %s8 = scalar_lea.sflag [#allocation4], 1
    %9 = vsyncpa %s8, 0
    %10 = vsyncpa [#allocation7], 0
    %s11 = scalar_lea.sflag [#allocation7], 1
    %12 = vsyncpa %s11, 0
    %13 = vsyncpa [#allocation5], 0
    %s14 = scalar_lea.sflag [#allocation5], 1
    %15 = vsyncpa %s14, 0
    loop: start=0, step=1, limit=6
    $region2: #{tpu_custom_call.1} parent=1 // loop_pre_header
      _
    $region3: #{tpu_custom_call.1} parent=1 // loop_header
      %s17 = sphi 0, %s21
      %p18 = scmp.ge.s32.totalorder %s17, 6
      %s24 = sphi 0, %s36
      %s25 = sphi 0, %s32
      %s26 = sphi 0, %s24
      %s27 = sphi 0, %s25
      %s28 = sphi 0, %s26
      %s29 = sphi 0, %s27
      %s41 = sphi 0, %s43
      %s44 = sphi 0, %s41
      %s45 = sphi 0, %s44
      %s61 = sphi 0, %s45
      %s67 = sphi 0, %s69
      %s70 = sphi 0, %s67
      %s71 = sphi 0, %s70
      %s87 = sphi 0, %s71
      %s93 = sphi 0, %s95
      %s96 = sphi 0, %s93
      %s97 = sphi 0, %s96
      %s113 = sphi 0, %s97
    $region4: #{tpu_custom_call.1} parent=1 // loop_header_branch
      %20 = sbr.rel (%p18) target = $region8
    $region5: #{tpu_custom_call.1} parent=1 // loop_body
      %s22 = ssub.s32 %s17, 1
      %s23 = ssub.s32 %s17, 2
      %s30 = sadd.s32 1, %s25
      %p31 = scmp.ge.s32.totalorder %s30, 2
      %s32 = scalar_select %p31, 0, %s30
      %s33 = sadd.s32 1, %s24
      %s34 = scalar_select %p31, %s33, %s24
      %p35 = scmp.ge.s32.totalorder %s34, 2
      %s36 = scalar_select %p35, 0, %s34
      %s37 = ssub.s32 %s24, %s36
      %s38 = ssub.s32 %s25, %s32
      %s39 = sor.u32 %s37, %s38
      %p40 = scmp.eq.s32.totalorder %s39, 0
      %s42 = sadd.s32 %s41, 1
      %s43 = scalar_select %p40, %s41, %s42
      %p46 = pneg %p40
      %p47 = scmp.eq.s32.totalorder %s17, 3
      %p48 = por %p46, %p47
      %p49 = scmp.ne.s32.totalorder %s41, %s44
      %p50 = scmp.eq.s32.totalorder %s17, 0
      %p51 = por %p49, %p50
      %p52 = scmp.ne.s32.totalorder %s41, %s44
      %p53 = scmp.eq.s32.totalorder %s22, 3
      %p54 = por %p52, %p53
      %p55 = scmp.ne.s32.totalorder %s44, %s45
      %p56 = scmp.eq.s32.totalorder %s22, 0
      %p57 = por %p55, %p56
      %p58 = scmp.ne.s32.totalorder %s44, %s45
      %p59 = scmp.eq.s32.totalorder %s23, 3
      %p60 = por %p58, %p59
      %p62 = scmp.ne.s32.totalorder %s45, %s61
      %p63 = scmp.eq.s32.totalorder %s23, 0
      %p64 = por %p62, %p63
      %s65 = ssub.s32 %s25, %s32
      %p66 = scmp.eq.s32.totalorder %s65, 0
      %s68 = sadd.s32 %s67, 1
      %s69 = scalar_select %p66, %s67, %s68
      %p72 = pneg %p66
      %p73 = scmp.eq.s32.totalorder %s17, 3
      %p74 = por %p72, %p73
      %p75 = scmp.ne.s32.totalorder %s67, %s70
      %p76 = scmp.eq.s32.totalorder %s17, 0
      %p77 = por %p75, %p76
      %p78 = scmp.ne.s32.totalorder %s67, %s70
      %p79 = scmp.eq.s32.totalorder %s22, 3
      %p80 = por %p78, %p79
      %p81 = scmp.ne.s32.totalorder %s70, %s71
      %p82 = scmp.eq.s32.totalorder %s22, 0
      %p83 = por %p81, %p82
      %p84 = scmp.ne.s32.totalorder %s70, %s71
      %p85 = scmp.eq.s32.totalorder %s23, 3
      %p86 = por %p84, %p85
      %p88 = scmp.ne.s32.totalorder %s71, %s87
      %p89 = scmp.eq.s32.totalorder %s23, 0
      %p90 = por %p88, %p89
      %s91 = ssub.s32 %s24, %s36
      %p92 = scmp.eq.s32.totalorder %s91, 0
      %s94 = sadd.s32 %s93, 1
      %s95 = scalar_select %p92, %s93, %s94
      %p98 = pneg %p92
      %p99 = scmp.eq.s32.totalorder %s17, 3
      %p100 = por %p98, %p99
      %p101 = scmp.ne.s32.totalorder %s93, %s96
      %p102 = scmp.eq.s32.totalorder %s17, 0
      %p103 = por %p101, %p102
      %p104 = scmp.ne.s32.totalorder %s93, %s96
      %p105 = scmp.eq.s32.totalorder %s22, 3
      %p106 = por %p104, %p105
      %p107 = scmp.ne.s32.totalorder %s96, %s97
      %p108 = scmp.eq.s32.totalorder %s22, 0
      %p109 = por %p107, %p108
      %p110 = scmp.ne.s32.totalorder %s96, %s97
      %p111 = scmp.eq.s32.totalorder %s23, 3
      %p112 = por %p110, %p111
      %p114 = scmp.ne.s32.totalorder %s97, %s113
      %p115 = scmp.eq.s32.totalorder %s23, 0
      %p116 = por %p114, %p115
      %p117 = scmp.le.s32.totalorder 1, %s17
      %p118 = scmp.lt.s32.totalorder %s17, 5
      %p119 = pnand %p117, %p118
      %p120 = pneg %p119
      // Predicated region
      $region9: #{tpu_custom_call.1} parent=5 // pred_check
        _
      $region10: #{tpu_custom_call.1} parent=5 // pred_check_branch
        %122 = sbr.rel (%p119) target = $region12
      $region11: #{tpu_custom_call.1} parent=5 // pred_region
        %s123 = ssub.s32 %s17, 1
      $region12: #{tpu_custom_call.1} parent=5 // pred_fallthru
        _
      %p124 = scmp.lt.s32.totalorder %s17, 4
      // Predicated region
      $region13: #{tpu_custom_call.1} parent=5 // pred_check
        %p125 = pneg %p124
      $region14: #{tpu_custom_call.1} parent=5 // pred_check_branch
        %127 = sbr.rel (%p125) target = $region16
      $region15: #{tpu_custom_call.1} parent=5 // pred_region
        // Predicated region
        $region17: #{tpu_custom_call.1} parent=15 // pred_check
          %p128 = pneg %p51
        $region18: #{tpu_custom_call.1} parent=15 // pred_check_branch
          %130 = sbr.rel (%p128) target = $region20
        $region19: #{tpu_custom_call.1} parent=15 // pred_region
          %s131 = sand.u32 %s41, 1
          %s132 = scalar_lea.sflag [#allocation4], %s131
          %s133 = sand.u32 %s41, 1
          %s134 = smul.addr %s133, 4
          %s135 = scalar_lea.vmem [#allocation3], %s134
          %s137 = ssub.s32 64, 64
          %138 = vsyncadd %s132, %s137
          %s139 = smul.addr %s24, 2
          %s140 = sadd.s32 %s25, %s139
          %s141 = smul.addr %s140, 64
          %s142 = scalar_lea.hbm %s0, %s141
          %s144 = sshll.u32 %s135, 4
          %s145 = int_to_ptr.vmem [resolvable:$true] %s144
          %147 = dma.hbm_to_vmem [thread:$0]  %s142, 64, %s145, %s132
        $region20: #{tpu_custom_call.1} parent=15 // pred_fallthru
          _
        // Predicated region
        $region21: #{tpu_custom_call.1} parent=15 // pred_check
          %p148 = pneg %p77
        $region22: #{tpu_custom_call.1} parent=15 // pred_check_branch
          %150 = sbr.rel (%p148) target = $region24
        $region23: #{tpu_custom_call.1} parent=15 // pred_region
          %s151 = sand.u32 %s67, 1
          %s152 = scalar_lea.sflag [#allocation7], %s151
          %s153 = sand.u32 %s67, 1
          %s154 = smul.addr %s153, 128
          %s155 = scalar_lea.vmem [#allocation6], %s154
          %s156 = smul.u32 16, %s25
          %s158 = ssub.s32 2048, 2048
          %159 = vsyncadd %s152, %s158
          %s160 = smul.addr %s156, 2
          %s161 = smul.addr %s160, 64
          %s162 = scalar_lea.hbm %s1, %s161
          %s163 = sshll.u32 %s155, 4
          %s164 = int_to_ptr.vmem [resolvable:$true] %s163
          %169 = dma.hbm_to_vmem [thread:$0]  %s162, 2048, %s164, %s152, 128, 128, 8
        $region24: #{tpu_custom_call.1} parent=15 // pred_fallthru
          _
      $region16: #{tpu_custom_call.1} parent=5 // pred_fallthru
        _
      %p170 = scmp.le.s32.totalorder 1, %s17
      %p171 = scmp.lt.s32.totalorder %s17, 5
      %p172 = pnand %p170, %p171
      %p173 = pneg %p172
      // Predicated region
      $region25: #{tpu_custom_call.1} parent=5 // pred_check
        _
      $region26: #{tpu_custom_call.1} parent=5 // pred_check_branch
        %175 = sbr.rel (%p172) target = $region28
      $region27: #{tpu_custom_call.1} parent=5 // pred_region
        %s176 = ssub.s32 %s17, 1
        %s177 = sand.u32 %s44, 1
        %s178 = scalar_lea.sflag [#allocation4], %s177
        %s179 = sand.u32 %s44, 1
        %s180 = smul.addr %s179, 4
        %s181 = scalar_lea.vmem [#allocation3], %s180
        // Predicated region
        $region29: #{tpu_custom_call.1} parent=27 // pred_check
          %p182 = pneg %p57
        $region30: #{tpu_custom_call.1} parent=27 // pred_check_branch
          %184 = sbr.rel (%p182) target = $region32
        $region31: #{tpu_custom_call.1} parent=27 // pred_region
          %185 = dma.done %s178, 64
        $region32: #{tpu_custom_call.1} parent=27 // pred_fallthru
          _
        %s186 = sand.u32 %s70, 1
        %s187 = scalar_lea.sflag [#allocation7], %s186
        %s188 = sand.u32 %s70, 1
        %s189 = smul.addr %s188, 128
        %s190 = scalar_lea.vmem [#allocation6], %s189
        // Predicated region
        $region33: #{tpu_custom_call.1} parent=27 // pred_check
          %p191 = pneg %p83
        $region34: #{tpu_custom_call.1} parent=27 // pred_check_branch
          %193 = sbr.rel (%p191) target = $region36
        $region35: #{tpu_custom_call.1} parent=27 // pred_region
          %194 = dma.done %s187, 2048
        $region36: #{tpu_custom_call.1} parent=27 // pred_fallthru
          _
        %s195 = sand.u32 %s44, 1
        %s196 = scalar_lea.sflag [#allocation4], %s195
        %s197 = sand.u32 %s44, 1
        %s198 = smul.addr %s197, 4
        %s199 = scalar_lea.vmem [#allocation3], %s198
        %p200 = pneg %p57
        %p201 = pneg %p54
        %s202 = sand.u32 %s70, 1
        %s203 = scalar_lea.sflag [#allocation7], %s202
        %s204 = sand.u32 %s70, 1
        %s205 = smul.addr %s204, 128
        %s206 = scalar_lea.vmem [#allocation6], %s205
        %p207 = pneg %p83
        %p208 = pneg %p80
        %p209 = pneg %p109
        %p210 = pneg %p106
        %s211 = sand.u32 %s96, 1
        %s212 = scalar_lea.sflag [#allocation5], %s211
        %s213 = sand.u32 %s96, 1
        %s214 = smul.addr %s213, 16
        %s215 = scalar_lea.vmem [#allocation8], %s214
        %s216 = smul.u32 16, %s27
        %p218 = scmp.eq.s32.totalorder %s27, 0
        // Predicated region
        $region37: #{tpu_custom_call.1} parent=27 // pred_check
          %p219 = pneg %p218
        $region38: #{tpu_custom_call.1} parent=27 // pred_check_branch
          %221 = sbr.rel (%p219) target = $region40
        $region39: #{tpu_custom_call.1} parent=27 // pred_region
          %222 = vst [vmem:[#allocation2] sm:$0xff] 0.0
          %223 = vst [vmem:[#allocation2 + $0x8] sm:$0xff] 0.0
        $region40: #{tpu_custom_call.1} parent=27 // pred_fallthru
          _
        %v224 = vld [vmem:[#allocation2] sm:$0xff]
        %v225 = vld [vmem:[#allocation2 + $0x8] sm:$0xff]
        %v226 = vld [vmem:[%s181] sm:$0xf]
        %v227 = vld [vmem:[%s190] sm:$0xff]
        %v228 = vld [vmem:[%s190 + $0x8] sm:$0xff]
        %v229 = vld [vmem:[%s190 + $0x10] sm:$0xff]
        %v230 = vld [vmem:[%s190 + $0x18] sm:$0xff]
        %v231 = vld [vmem:[%s190 + $0x20] sm:$0xff]
        %v232 = vld [vmem:[%s190 + $0x28] sm:$0xff]
        %v233 = vld [vmem:[%s190 + $0x30] sm:$0xff]
        %v234 = vld [vmem:[%s190 + $0x38] sm:$0xff]
        %v235 = vld [vmem:[%s190 + $0x40] sm:$0xff]
        %v236 = vld [vmem:[%s190 + $0x48] sm:$0xff]
        %v237 = vld [vmem:[%s190 + $0x50] sm:$0xff]
        %v238 = vld [vmem:[%s190 + $0x58] sm:$0xff]
        %v239 = vld [vmem:[%s190 + $0x60] sm:$0xff]
        %v240 = vld [vmem:[%s190 + $0x68] sm:$0xff]
        %v241 = vld [vmem:[%s190 + $0x70] sm:$0xff]
        %v242 = vld [vmem:[%s190 + $0x78] sm:$0xff]
        %v259 = vunpack.c.l.b16 %v227
        %v260 = vunpack.c.h.b16 %v227
        %v261 = vunpack.c.l.b16 %v228
        %v262 = vunpack.c.h.b16 %v228
        %v263 = vunpack.c.l.b16 %v229
        %v264 = vunpack.c.h.b16 %v229
        %v265 = vunpack.c.l.b16 %v230
        %v266 = vunpack.c.h.b16 %v230
        %v267 = vunpack.c.l.b16 %v231
        %v268 = vunpack.c.h.b16 %v231
        %v269 = vunpack.c.l.b16 %v232
        %v270 = vunpack.c.h.b16 %v232
        %v271 = vunpack.c.l.b16 %v233
        %v272 = vunpack.c.h.b16 %v233
        %v273 = vunpack.c.l.b16 %v234
        %v274 = vunpack.c.h.b16 %v234
        %v275 = vunpack.c.l.b16 %v235
        %v276 = vunpack.c.h.b16 %v235
        %v277 = vunpack.c.l.b16 %v236
        %v278 = vunpack.c.h.b16 %v236
        %v279 = vunpack.c.l.b16 %v237
        %v280 = vunpack.c.h.b16 %v237
        %v281 = vunpack.c.l.b16 %v238
        %v282 = vunpack.c.h.b16 %v238
        %v283 = vunpack.c.l.b16 %v239
        %v284 = vunpack.c.h.b16 %v239
        %v285 = vunpack.c.l.b16 %v240
        %v286 = vunpack.c.h.b16 %v240
        %v287 = vunpack.c.l.b16 %v241
        %v288 = vunpack.c.h.b16 %v241
        %v289 = vunpack.c.l.b16 %v242
        %v290 = vunpack.c.h.b16 %v242
        %v291 = vpack.c.b16 %v261, %v259
        %v292 = vpack.c.b16 %v262, %v260
        %v293 = vpack.c.b16 %v265, %v263
        %v294 = vpack.c.b16 %v266, %v264
        %v295 = vpack.c.b16 %v269, %v267
        %v296 = vpack.c.b16 %v270, %v268
        %v297 = vpack.c.b16 %v273, %v271
        %v298 = vpack.c.b16 %v274, %v272
        %v299 = vpack.c.b16 %v277, %v275
        %v300 = vpack.c.b16 %v278, %v276
        %v301 = vpack.c.b16 %v281, %v279
        %v302 = vpack.c.b16 %v282, %v280
        %v303 = vpack.c.b16 %v285, %v283
        %v304 = vpack.c.b16 %v286, %v284
        %v305 = vpack.c.b16 %v289, %v287
        %v306 = vpack.c.b16 %v290, %v288
        %323 = vmatprep.subr.bf16.mxu0 %v292
        %324 = vmatpush1.bf16.msra.mxu0 %v291
        %325 = vmatprep.subr.bf16.mxu0 %v294
        %326 = vmatpush1.bf16.msra.mxu0 %v293
        %327 = vmatprep.subr.bf16.mxu0 %v296
        %328 = vmatpush1.bf16.msra.mxu0 %v295
        %329 = vmatprep.subr.bf16.mxu0 %v298
        %330 = vmatpush1.bf16.msra.mxu0 %v297
        %331 = vmatprep.subr.bf16.mxu0 %v300
        %332 = vmatpush1.bf16.msra.mxu0 %v299
        %333 = vmatprep.subr.bf16.mxu0 %v302
        %334 = vmatpush1.bf16.msra.mxu0 %v301
        %335 = vmatprep.subr.bf16.mxu0 %v304
        %336 = vmatpush1.bf16.msra.mxu0 %v303
        %337 = vmatprep.subr.bf16.mxu0 %v306
        %338 = vmatpush1.bf16.msra.mxu0 %v305
        %339 = vmatprep.subr.bf16.mxu0 0
        %340 = vmatpush1.bf16.msra.mxu0 0
        %341 = vmatprep.subr.bf16.mxu0 0
        %342 = vmatpush1.bf16.msra.mxu0 0
        %343 = vmatprep.subr.bf16.mxu0 0
        %344 = vmatpush1.bf16.msra.mxu0 0
        %345 = vmatprep.subr.bf16.mxu0 0
        %346 = vmatpush1.bf16.msra.mxu0 0
        %347 = vmatprep.subr.bf16.mxu0 0
        %348 = vmatpush1.bf16.msra.mxu0 0
        %349 = vmatprep.subr.bf16.mxu0 0
        %350 = vmatpush1.bf16.msra.mxu0 0
        %351 = vmatprep.subr.bf16.mxu0 0
        %352 = vmatpush1.bf16.msra.mxu0 0
        %353 = vmatprep.subr.bf16.mxu0 0
        %354 = vmatpush1.bf16.msra.mxu0 0
        %355 = vmatprep.mubr.bf16.mxu0 0
        %356 = vmatmul.mubr.bf16.gmra.mrb[0].mxu0 %v226
        %v357 = vpop.f32.mrb[0].mxu0
        %v358 = vadd.f32 0.0, %v357
        %v359 = vpop.f32.mrb[0].mxu0
        %v360 = vadd.f32 0.0, %v359
        %v361 = vpop.f32.mrb[0].mxu0
        %v362 = vpop.f32.mrb[0].mxu0
        %363 = vdwg.mxu0
        %v364 = vadd.f32 %v224, %v358
        %v365 = vadd.f32 %v225, %v360
        %366 = vst [vmem:[#allocation2] sm:$0xff] %v364
        %367 = vst [vmem:[#allocation2 + $0x8] sm:$0xff] %v365
        %p368 = scmp.eq.s32.totalorder %s27, 1
        // Predicated region
        $region41: #{tpu_custom_call.1} parent=27 // pred_check
          %p369 = pneg %p368
        $region42: #{tpu_custom_call.1} parent=27 // pred_check_branch
          %371 = sbr.rel (%p369) target = $region44
        $region43: #{tpu_custom_call.1} parent=27 // pred_region
          %v372 = vld [vmem:[#allocation2] sm:$0xff]
          %v373 = vld [vmem:[#allocation2 + $0x8] sm:$0xff]
          %v374 = vmax.f32 %v372, %v373
          %375 = vmax.xlane.f32.xlu0 %v374
          %v376 = vpop.xlane.xlu0 %375
          %vm377 = vcmp.eq.f32.partialorder %v372, %v376
          %vm378 = vcmp.eq.f32.partialorder %v373, %v376
          %v379 = vsel %vm377, -inf, %v372
          %v380 = vsel %vm378, -inf, %v373
          %v381 = vmax.f32 %v379, %v380
          %382 = vmax.xlane.f32.xlu0 %v381
          %v383 = vpop.xlane.xlu0 %382
          %vm384 = vcmp.eq.f32.partialorder %v379, %v383
          %vm385 = vcmp.eq.f32.partialorder %v380, %v383
          %v386 = vsel %vm384, -inf, %v379
          %v387 = vsel %vm385, -inf, %v380
          %v388 = vmax.f32 %v386, %v387
          %389 = vmax.xlane.f32.xlu0 %v388
          %v390 = vpop.xlane.xlu0 %389
          %vm391 = vcmp.eq.f32.partialorder %v386, %v390
          %vm392 = vcmp.eq.f32.partialorder %v387, %v390
          %v393 = vsel %vm391, -inf, %v386
          %v394 = vsel %vm392, -inf, %v387
          %v395 = vmax.f32 %v393, %v394
          %396 = vmax.xlane.f32.xlu0 %v395
          %v397 = vpop.xlane.xlu0 %396
          %vm398 = vcmp.ge.f32.partialorder %v372, %v397
          %vm399 = vcmp.ge.f32.partialorder %v373, %v397
          %v400 = vsel %vm398, %v372, 0.0
          %v401 = vsel %vm399, %v373, 0.0
          %402 = vst [vmem:[%s215] sm:$0xff] %v400
          %403 = vst [vmem:[%s215 + $0x8] sm:$0xff] %v401
        $region44: #{tpu_custom_call.1} parent=27 // pred_fallthru
          _
        %s404 = sand.u32 %s96, 1
        %s405 = scalar_lea.sflag [#allocation5], %s404
        %s406 = sand.u32 %s96, 1
        %s407 = smul.addr %s406, 16
        %s408 = scalar_lea.vmem [#allocation8], %s407
        // Predicated region
        $region45: #{tpu_custom_call.1} parent=27 // pred_check
          %p409 = pneg %p106
        $region46: #{tpu_custom_call.1} parent=27 // pred_check_branch
          %411 = sbr.rel (%p409) target = $region48
        $region47: #{tpu_custom_call.1} parent=27 // pred_region
          %s413 = ssub.s32 256, 256
          %414 = vsyncadd %s405, %s413
          %s415 = smul.addr %s26, 2
          %s416 = smul.addr %s415, 128
          %s417 = scalar_lea.hbm %s2, %s416
          %s419 = sshll.u32 %s408, 4
          %s420 = int_to_ptr.vmem [resolvable:$true] %s419
          %422 = dma.vmem_to_hbm [thread:$0]  %s420, 256, %s417, %s405
        $region48: #{tpu_custom_call.1} parent=27 // pred_fallthru
          _
      $region28: #{tpu_custom_call.1} parent=5 // pred_fallthru
        _
      %p423 = scmp.le.s32.totalorder 2, %s17
      // Predicated region
      $region49: #{tpu_custom_call.1} parent=5 // pred_check
        %p424 = pneg %p423
      $region50: #{tpu_custom_call.1} parent=5 // pred_check_branch
        %426 = sbr.rel (%p424) target = $region52
      $region51: #{tpu_custom_call.1} parent=5 // pred_region
        %s427 = ssub.s32 %s17, 2
        // Predicated region
        $region53: #{tpu_custom_call.1} parent=51 // pred_check
          %p428 = pneg %p112
        $region54: #{tpu_custom_call.1} parent=51 // pred_check_branch
          %430 = sbr.rel (%p428) target = $region56
        $region55: #{tpu_custom_call.1} parent=51 // pred_region
          %s431 = sand.u32 %s97, 1
          %s432 = scalar_lea.sflag [#allocation5], %s431
          %s433 = sand.u32 %s97, 1
          %s434 = smul.addr %s433, 16
          %s435 = scalar_lea.vmem [#allocation8], %s434
          %436 = dma.done %s432, 256
        $region56: #{tpu_custom_call.1} parent=51 // pred_fallthru
          _
      $region52: #{tpu_custom_call.1} parent=5 // pred_fallthru
        _
    $region6: #{tpu_custom_call.1} parent=1 // loop_footer
      %s21 = sadd.s32 1, %s17
    $region7: #{tpu_custom_call.1} parent=1 // loop_footer_branch
      %16 = sbr.rel target = $region3
    $region8: #{tpu_custom_call.1} parent=1 // loop_exit
      _
    %437 = vsyncpa [#allocation4], 1
    %s438 = scalar_lea.sflag [#allocation4], 1
    %439 = vsyncpa %s438, 1
    %440 = vsyncpa [#allocation7], 1
    %s441 = scalar_lea.sflag [#allocation7], 1
    %442 = vsyncpa %s441, 1
    %443 = vsyncpa [#allocation5], 1
    %s444 = scalar_lea.sflag [#allocation5], 1
    %445 = vsyncpa %s444, 1

</llo_original>
